<compile_context>
chip_gen: v7x
topology: tpu7x:2x2x1
jax: 0.10.0
libtpu: 0.0.40
codegen_flags: <defaults>
</compile_context>

<pallas_src>
import functools

import jax
import jax.numpy as jnp
from jax import lax
from jax.experimental import pallas as pl
from jax.experimental.pallas import tpu as pltpu


# ---------------------------------------------------------------------------
# Kernel 1: input projection hoisted off the serial critical path.
# ---------------------------------------------------------------------------
def _proj_kernel(x_ref, wx_ref, b_ref, pre_ref):
    tb, bsz, isz = x_ref.shape
    x2d = x_ref[...].reshape(tb * bsz, isz)            # merge leading dims (layout no-op)
    pre = jnp.dot(x2d, wx_ref[...], preferred_element_type=jnp.float32)
    pre = pre + b_ref[...]                             # single fused bias (bx + bh)
    pre_ref[...] = pre.reshape(tb, bsz, -1).astype(pre_ref.dtype)


# ---------------------------------------------------------------------------
# Kernel 2: the unavoidable serial recurrence (one small matmul per timestep).
# ---------------------------------------------------------------------------
def _recurrence_kernel(pre_ref, h0_ref, wh_ref, hseq_ref, h_scratch, *, activation):
    @pl.when(pl.program_id(0) == 0)
    def _():
        h_scratch[...] = h0_ref[...]

    wh = wh_ref[...]                                   # resident weight, load once/block
    t_block = hseq_ref.shape[0]

    def step(i, h):
        pre = pre_ref[i] + jnp.dot(h, wh, preferred_element_type=jnp.float32)
        if activation == "relu":
            h_new = jnp.maximum(pre, 0.0)
        else:
            h_new = jnp.tanh(pre)
        hseq_ref[i] = h_new.astype(hseq_ref.dtype)
        return h_new

    # Fully unrolled static inner loop over the timestep block.
    h_final = lax.fori_loop(0, t_block, step, h_scratch[...], unroll=True)
    h_scratch[...] = h_final
    # NOTE: no h_last output written every step anymore (perf review item);
    # the wrapper slices h_seq[-1:].
    # NOTE(perf, large hidden): mark wh with pipeline_mode=pl.Buffered(1) and/or
    # bf16-cast it (keep f32 accumulation) to fit v7x's 64 MiB VMEM.


def _pick_t_block(seq_len, max_block=8):
    for tb in range(min(seq_len, max_block), 0, -1):
        if seq_len % tb == 0:
            return tb
    return 1


def rnn_forward(x, h0, wx, bx, wh, bh, *, activation="tanh", t_block=None):
    """
    x  : (seq_len, batch, input_size)  float32
    h0 : (1, batch, hidden)            float32 (initial hidden state; zeros == module default)
    wx : (input_size, hidden)          (already transposed vs torch's (hidden, input))
    bx : (hidden,)
    wh : (hidden, hidden)              (already transposed)
    bh : (hidden,)
    Returns (h_seq, h_last) with shapes (seq, batch, hidden), (1, batch, hidden).
    """
    seq_len, batch, input_size = x.shape
    hidden = wh.shape[0]
    if t_block is None:
        t_block = _pick_t_block(seq_len)
    assert seq_len % t_block == 0, "t_block must divide seq_len"
    n_blocks = seq_len // t_block

    b_fused = (bx + bh).reshape(1, hidden).astype(jnp.float32)   # pre-summed biases
    h0_2d = h0.reshape(batch, hidden)

    # --- stage 1: embarrassingly parallel input projection -----------------
    pre = pl.pallas_call(
        _proj_kernel,
        out_shape=jax.ShapeDtypeStruct((seq_len, batch, hidden), jnp.float32),
        grid_spec=pltpu.PrefetchScalarGridSpec(
            num_scalar_prefetch=0,
            grid=(n_blocks,),
            in_specs=[
                pl.BlockSpec((t_block, batch, input_size), lambda t: (t, 0, 0)),  # x block
                pl.BlockSpec((input_size, hidden), lambda t: (0, 0)),             # wx
                pl.BlockSpec((1, hidden), lambda t: (0, 0)),                      # bx+bh
            ],
            out_specs=pl.BlockSpec((t_block, batch, hidden), lambda t: (t, 0, 0)),
        ),
        compiler_params=pltpu.CompilerParams(dimension_semantics=("parallel",)),
    )(x, wx, b_fused)

    # --- stage 2: sequential recurrence, t_block timesteps per grid step ----
    kernel = functools.partial(_recurrence_kernel, activation=activation)
    h_seq = pl.pallas_call(
        kernel,
        out_shape=jax.ShapeDtypeStruct((seq_len, batch, hidden), jnp.float32),
        grid_spec=pltpu.PrefetchScalarGridSpec(
            num_scalar_prefetch=0,
            grid=(n_blocks,),
            in_specs=[
                pl.BlockSpec((t_block, batch, hidden), lambda t: (t, 0, 0)),      # pre
                pl.BlockSpec((batch, hidden), lambda t: (0, 0)),                  # h0
                pl.BlockSpec((hidden, hidden), lambda t: (0, 0)),                 # wh (resident)
            ],
            out_specs=pl.BlockSpec((t_block, batch, hidden), lambda t: (t, 0, 0)),
            scratch_shapes=[pltpu.VMEM((batch, hidden), jnp.float32)],
        ),
        compiler_params=pltpu.CompilerParams(
            dimension_semantics=("arbitrary",),   # recurrence: sequential grid axis
        ),
    )(pre, h0_2d, wh)

    h_last = h_seq[-1:]                           # (1, batch, hidden), no extra store
    return h_seq, h_last


def rnn_reference(x, h0, wx, bx, wh, bh, *, activation="tanh"):
    act = (lambda v: jnp.maximum(v, 0.0)) if activation == "relu" else jnp.tanh
    h = h0[0]
    hs = []
    for i in range(x.shape[0]):
        h = act(h @ wh + bh + x[i] @ wx + bx)
        hs.append(h)
    return jnp.stack(hs, axis=0), h[None]


if __name__ == "__main__":
    seq_len, batch, input_size, hidden = 16, 8, 4, 32
    activation = "tanh"

    key = jax.random.PRNGKey(0)
    kx, kwx, kbx, kwh, kbh = jax.random.split(key, 5)

    # Deterministic parameter init (PyTorch-Linear-style uniform bounds).
    bound_x = 1.0 / jnp.sqrt(input_size)
    bound_h = 1.0 / jnp.sqrt(hidden)
    wx = jax.random.uniform(kwx, (input_size, hidden), jnp.float32, -bound_x, bound_x)
    bx = jax.random.uniform(kbx, (hidden,), jnp.float32, -bound_x, bound_x)
    wh = jax.random.uniform(kwh, (hidden, hidden), jnp.float32, -bound_h, bound_h)
    bh = jax.random.uniform(kbh, (hidden,), jnp.float32, -bound_h, bound_h)

    x = jax.random.normal(kx, (seq_len, batch, input_size), jnp.float32)
    h0 = jnp.zeros((1, batch, hidden), jnp.float32)   # module default: h=None -> zeros

    h_seq, h_last = rnn_forward(x, h0, wx, bx, wh, bh, activation=activation)
    jax.block_until_ready((h_seq, h_last))

    h_seq_ref, h_last_ref = rnn_reference(x, h0, wx, bx, wh, bh, activation=activation)
    assert h_seq.shape == (seq_len, batch, hidden)
    assert h_last.shape == (1, batch, hidden)
    assert jnp.allclose(h_seq, h_seq_ref, atol=1e-5, rtol=1e-5)
    assert jnp.allclose(h_last, h_last_ref, atol=1e-5, rtol=1e-5)

    print("KERNEL_OK")
</pallas_src>

<mosaic_0001>
module attributes {stable_mosaic.version = 11 : i64} {
  func.func @_proj_kernel(%arg0: i32, %arg1: memref<8x8x4xf32, #tpu.memory_space<vmem>>, %arg2: memref<4x32xf32, #tpu.memory_space<vmem>>, %arg3: memref<1x32xf32, #tpu.memory_space<vmem>>, %arg4: memref<8x8x32xf32, #tpu.memory_space<vmem>>) attributes {dimension_semantics = [#tpu.dimension_semantics<parallel>], iteration_bounds = array<i64: 2>, scalar_prefetch = 0 : i64, scratch_operands = 0 : i64, tpu.core_type = #tpu.core_type<tc>, window_params = [{transform_indices = @transform_0, window_bounds = array<i64: 8, 8, 4>}, {pipeline_mode = #tpu.pipeline_mode<synchronous>, transform_indices = @transform_1, window_bounds = array<i64: 4, 32>}, {pipeline_mode = #tpu.pipeline_mode<synchronous>, transform_indices = @transform_2, window_bounds = array<i64: 1, 32>}, {transform_indices = @transform_3, window_bounds = array<i64: 8, 8, 32>}]} {
    %c0 = arith.constant 0 : index
    %c0_0 = arith.constant 0 : index
    %c0_1 = arith.constant 0 : index
    %0 = vector.load %arg1[%c0, %c0_0, %c0_1] : memref<8x8x4xf32, #tpu.memory_space<vmem>>, vector<8x8x4xf32>
    %1 = vector.shape_cast %0 : vector<8x8x4xf32> to vector<64x4xf32>
    %c0_2 = arith.constant 0 : index
    %c0_3 = arith.constant 0 : index
    %2 = vector.load %arg2[%c0_2, %c0_3] : memref<4x32xf32, #tpu.memory_space<vmem>>, vector<4x32xf32>
    %cst = arith.constant dense<0.000000e+00> : vector<64x32xf32>
    %3 = tpu.matmul %1, %2, %cst {dimension_numbers = #tpu.dot_dimension_numbers<[1], [0], [0], [1], [0, 0, 1, 1], [], []>} : vector<64x4xf32>, vector<4x32xf32>, vector<64x32xf32> -> vector<64x32xf32>
    %c0_4 = arith.constant 0 : index
    %c0_5 = arith.constant 0 : index
    %4 = vector.load %arg3[%c0_4, %c0_5] : memref<1x32xf32, #tpu.memory_space<vmem>>, vector<1x32xf32>
    %5 = vector.broadcast %4 : vector<1x32xf32> to vector<64x32xf32>
    %6 = arith.addf %3, %5 : vector<64x32xf32>
    %7 = vector.shape_cast %6 : vector<64x32xf32> to vector<8x8x32xf32>
    %c0_6 = arith.constant 0 : index
    %c0_7 = arith.constant 0 : index
    %c0_8 = arith.constant 0 : index
    %8 = vector.load %arg4[%c0_6, %c0_7, %c0_8] : memref<8x8x32xf32, #tpu.memory_space<vmem>>, vector<8x8x32xf32>
    tpu.vector_store %arg4[%c0_6, %c0_7, %c0_8], %7 {strides = array<i32>} : memref<8x8x32xf32, #tpu.memory_space<vmem>>, vector<8x8x32xf32>,
    return
  }
  func.func @transform_0(%arg0: i32) -> (i32, i32, i32) {
    %c0_i32 = arith.constant 0 : i32
    %c0_i32_0 = arith.constant 0 : i32
    %c0_i32_1 = arith.constant 0 : i32
    return %arg0, %c0_i32, %c0_i32_0 : i32, i32, i32
  }
  func.func @transform_1(%arg0: i32) -> (i32, i32) {
    %c0_i32 = arith.constant 0 : i32
    %c0_i32_0 = arith.constant 0 : i32
    %c0_i32_1 = arith.constant 0 : i32
    return %c0_i32, %c0_i32_0 : i32, i32
  }
  func.func @transform_2(%arg0: i32) -> (i32, i32) {
    %c0_i32 = arith.constant 0 : i32
    %c0_i32_0 = arith.constant 0 : i32
    %c0_i32_1 = arith.constant 0 : i32
    return %c0_i32, %c0_i32_0 : i32, i32
  }
  func.func @transform_3(%arg0: i32) -> (i32, i32, i32) {
    %c0_i32 = arith.constant 0 : i32
    %c0_i32_0 = arith.constant 0 : i32
    %c0_i32_1 = arith.constant 0 : i32
    return %arg0, %c0_i32, %c0_i32_0 : i32, i32, i32
  }
}

</mosaic_0001>

<llo_original>
// kernel: tpu_custom_call.1
$region0: #{tpu_custom_call.1}
  #allocation0 [shape = 'u32[]', space=smem, size = 0x4, offset = 0x4, fixed_abs, tag = 'smem constant byte address 0x4 - core index']
  #allocation1 [shape = 'u32[144,128]{1,0:T(1,128)}', space=vmem, size = 0x12000, scoped, tag = 'internal scratch']
  %s0 = inlined_call_operand.vmem [shape: f32[16,8,4], index: 0, kind: input, shape index: {}]
  %s1 = inlined_call_operand.vmem [shape: f32[4,32], index: 1, kind: input, shape index: {}]
  %s2 = inlined_call_operand.vmem [shape: f32[1,32], index: 2, kind: input, shape index: {}]
  %s3 = inlined_call_operand.hbm [shape: f32[16,8,32], index: 3, kind: output, shape index: {}]
  %s4 = sld [smem:[#allocation0]]
  $region45: #{tpu_custom_call.1} parent=0
    _
  %s6 = ssub.s32 1, %s4
  %s7 = scalar_select 0, %s6, %s4
  $region1: #{tpu_custom_call.1} parent=0
    #allocation2 [shape = 'u8[65536]{0}', space=vmem, size = 0x10000, scoped, tag = 'output window, operand 0']
    #allocation3 [shape = 's32[2]{0}', space=sflag, size = 0x8, scoped, tag = 'scoped memory for tpu_custom_call.1']
    %8 = vsyncpa [#allocation3], 0
    %s9 = scalar_lea.sflag [#allocation3], 1
    %10 = vsyncpa %s9, 0
    loop: start=0, step=1, limit=4
    $region2: #{tpu_custom_call.1} parent=1 // loop_pre_header
      _
    $region3: #{tpu_custom_call.1} parent=1 // loop_header
      %s12 = sphi 0, %s16
      %p13 = scmp.ge.s32.totalorder %s12, 4
      %s22 = sphi 0, %s24
      %s25 = sphi 0, %s22
      %s26 = sphi 0, %s25
      %s42 = sphi 0, %s26
      %s46 = sphi 0, %s46
      %s48 = sphi 0, %s46
      %s49 = sphi 0, %s48
      %s63 = sphi 0, %s49
      %s67 = sphi 0, %s67
      %s69 = sphi 0, %s67
      %s70 = sphi 0, %s69
      %s84 = sphi 0, %s70
      %s90 = sphi 0, %s92
      %s93 = sphi 0, %s90
      %s94 = sphi 0, %s93
      %s110 = sphi 0, %s94
    $region4: #{tpu_custom_call.1} parent=1 // loop_header_branch
      %15 = sbr.rel (%p13) target = $region8
    $region5: #{tpu_custom_call.1} parent=1 // loop_body
      %s17 = ssub.s32 %s12, 1
      %s18 = ssub.s32 %s12, 2
      %s19 = sadd.s32 %s12, 1
      %s20 = ssub.s32 %s12, %s19
      %p21 = scmp.eq.s32.totalorder %s20, 0
      %s23 = sadd.s32 %s22, 1
      %s24 = scalar_select %p21, %s22, %s23
      %p27 = pneg %p21
      %p28 = scmp.eq.s32.totalorder %s12, 1
      %p29 = por %p27, %p28
      %p30 = scmp.ne.s32.totalorder %s22, %s25
      %p31 = scmp.eq.s32.totalorder %s12, 0
      %p32 = por %p30, %p31
      %p33 = scmp.ne.s32.totalorder %s22, %s25
      %p34 = scmp.eq.s32.totalorder %s17, 1
      %p35 = por %p33, %p34
      %p36 = scmp.ne.s32.totalorder %s25, %s26
      %p37 = scmp.eq.s32.totalorder %s17, 0
      %p38 = por %p36, %p37
      %p39 = scmp.ne.s32.totalorder %s25, %s26
      %p40 = scmp.eq.s32.totalorder %s18, 1
      %p41 = por %p39, %p40
      %p43 = scmp.ne.s32.totalorder %s26, %s42
      %p44 = scmp.eq.s32.totalorder %s18, 0
      %p45 = por %p43, %p44
      %s47 = sadd.s32 %s46, 1
      %p50 = scmp.eq.s32.totalorder %s12, 1
      %p51 = scmp.ne.s32.totalorder %s46, %s48
      %p52 = scmp.eq.s32.totalorder %s12, 0
      %p53 = por %p51, %p52
      %p54 = scmp.ne.s32.totalorder %s46, %s48
      %p55 = scmp.eq.s32.totalorder %s17, 1
      %p56 = por %p54, %p55
      %p57 = scmp.ne.s32.totalorder %s48, %s49
      %p58 = scmp.eq.s32.totalorder %s17, 0
      %p59 = por %p57, %p58
      %p60 = scmp.ne.s32.totalorder %s48, %s49
      %p61 = scmp.eq.s32.totalorder %s18, 1
      %p62 = por %p60, %p61
      %p64 = scmp.ne.s32.totalorder %s49, %s63
      %p65 = scmp.eq.s32.totalorder %s18, 0
      %p66 = por %p64, %p65
      %s68 = sadd.s32 %s67, 1
      %p71 = scmp.eq.s32.totalorder %s12, 1
      %p72 = scmp.ne.s32.totalorder %s67, %s69
      %p73 = scmp.eq.s32.totalorder %s12, 0
      %p74 = por %p72, %p73
      %p75 = scmp.ne.s32.totalorder %s67, %s69
      %p76 = scmp.eq.s32.totalorder %s17, 1
      %p77 = por %p75, %p76
      %p78 = scmp.ne.s32.totalorder %s69, %s70
      %p79 = scmp.eq.s32.totalorder %s17, 0
      %p80 = por %p78, %p79
      %p81 = scmp.ne.s32.totalorder %s69, %s70
      %p82 = scmp.eq.s32.totalorder %s18, 1
      %p83 = por %p81, %p82
      %p85 = scmp.ne.s32.totalorder %s70, %s84
      %p86 = scmp.eq.s32.totalorder %s18, 0
      %p87 = por %p85, %p86
      %s88 = ssub.s32 %s12, %s19
      %p89 = scmp.eq.s32.totalorder %s88, 0
      %s91 = sadd.s32 %s90, 1
      %s92 = scalar_select %p89, %s90, %s91
      %p95 = pneg %p89
      %p96 = scmp.eq.s32.totalorder %s12, 1
      %p97 = por %p95, %p96
      %p98 = scmp.ne.s32.totalorder %s90, %s93
      %p99 = scmp.eq.s32.totalorder %s12, 0
      %p100 = por %p98, %p99
      %p101 = scmp.ne.s32.totalorder %s90, %s93
      %p102 = scmp.eq.s32.totalorder %s17, 1
      %p103 = por %p101, %p102
      %p104 = scmp.ne.s32.totalorder %s93, %s94
      %p105 = scmp.eq.s32.totalorder %s17, 0
      %p106 = por %p104, %p105
      %p107 = scmp.ne.s32.totalorder %s93, %s94
      %p108 = scmp.eq.s32.totalorder %s18, 1
      %p109 = por %p107, %p108
      %p111 = scmp.ne.s32.totalorder %s94, %s110
      %p112 = scmp.eq.s32.totalorder %s18, 0
      %p113 = por %p111, %p112
      %p114 = scmp.le.s32.totalorder 1, %s12
      %p115 = scmp.lt.s32.totalorder %s12, 3
      %p116 = pnand %p114, %p115
      %p117 = pneg %p116
      // Predicated region
      $region9: #{tpu_custom_call.1} parent=5 // pred_check
        _
      $region10: #{tpu_custom_call.1} parent=5 // pred_check_branch
        %119 = sbr.rel (%p116) target = $region12
      $region11: #{tpu_custom_call.1} parent=5 // pred_region
        %s120 = ssub.s32 %s12, 1
        // Predicated region
        $region13: #{tpu_custom_call.1} parent=11 // pred_check
          %p121 = pneg %p59
        $region14: #{tpu_custom_call.1} parent=11 // pred_check_branch
          %123 = sbr.rel (%p121) target = $region16
        $region15: #{tpu_custom_call.1} parent=11 // pred_region
          _
        $region16: #{tpu_custom_call.1} parent=11 // pred_fallthru
          _
        // Predicated region
        $region17: #{tpu_custom_call.1} parent=11 // pred_check
          %p124 = pneg %p80
        $region18: #{tpu_custom_call.1} parent=11 // pred_check_branch
          %126 = sbr.rel (%p124) target = $region20
        $region19: #{tpu_custom_call.1} parent=11 // pred_region
          _
        $region20: #{tpu_custom_call.1} parent=11 // pred_fallthru
          _
      $region12: #{tpu_custom_call.1} parent=5 // pred_fallthru
        _
      %p127 = scmp.lt.s32.totalorder %s12, 2
      // Predicated region
      $region21: #{tpu_custom_call.1} parent=5 // pred_check
        %p128 = pneg %p127
      $region22: #{tpu_custom_call.1} parent=5 // pred_check_branch
        %130 = sbr.rel (%p128) target = $region24
      $region23: #{tpu_custom_call.1} parent=5 // pred_region
        // Predicated region
        $region25: #{tpu_custom_call.1} parent=23 // pred_check
          %p131 = pneg %p32
        $region26: #{tpu_custom_call.1} parent=23 // pred_check_branch
          %133 = sbr.rel (%p131) target = $region28
        $region27: #{tpu_custom_call.1} parent=23 // pred_region
          %s134 = smul.u32 8, %s12
          %p135 = scmp.lt.s32.totalorder %s134, 15
          %s136 = scalar_select %p135, %s134, 15
          %s137 = smul.addr %s136, 8
          %s138 = scalar_lea.vmem %s0, %s137
          %s139 = smul.u32 8, %s12
        $region28: #{tpu_custom_call.1} parent=23 // pred_fallthru
          _
      $region24: #{tpu_custom_call.1} parent=5 // pred_fallthru
        _
      %p140 = scmp.le.s32.totalorder 1, %s12
      %p141 = scmp.lt.s32.totalorder %s12, 3
      %p142 = pnand %p140, %p141
      %p143 = pneg %p142
      // Predicated region
      $region29: #{tpu_custom_call.1} parent=5 // pred_check
        _
      $region30: #{tpu_custom_call.1} parent=5 // pred_check_branch
        %145 = sbr.rel (%p142) target = $region32
      $region31: #{tpu_custom_call.1} parent=5 // pred_region
        %s146 = ssub.s32 %s12, 1
        %s147 = smul.u32 8, %s17
        %p148 = scmp.lt.s32.totalorder %s147, 15
        %s149 = scalar_select %p148, %s147, 15
        %s150 = smul.addr %s149, 8
        %s151 = scalar_lea.vmem %s0, %s150
        %p152 = pneg %p38
        %p153 = pneg %p35
        %p154 = pneg %p59
        %p155 = pneg %p56
        %p156 = pneg %p80
        %p157 = pneg %p77
        %p158 = pneg %p106
        %p159 = pneg %p103
        %s160 = sand.u32 %s93, 1
        %s161 = scalar_lea.sflag [#allocation3], %s160
        %s162 = sand.u32 %s93, 1
        %s163 = smul.addr %s162, 64
        %s164 = scalar_lea.vmem [#allocation2], %s163
        %s165 = smul.u32 8, %s17
        %p166 = scmp.lt.s32.totalorder %s165, 15
        %s167 = scalar_select %p166, %s165, 15
        %s168 = smul.addr %s167, 8
        %s169 = scalar_lea.vmem %s0, %s168
        %s170 = smul.u32 8, %s17
        %s171 = smul.u32 8, %s17
        %v172 = vld [vmem:[%s169] sm:$0xff]
        %v173 = vld [vmem:[%s169 + $0x8] sm:$0xff]
        %v174 = vld [vmem:[%s169 + $0x10] sm:$0xff]
        %v175 = vld [vmem:[%s169 + $0x18] sm:$0xff]
        %v176 = vld [vmem:[%s169 + $0x20] sm:$0xff]
        %v177 = vld [vmem:[%s169 + $0x28] sm:$0xff]
        %v178 = vld [vmem:[%s169 + $0x30] sm:$0xff]
        %v179 = vld [vmem:[%s169 + $0x38] sm:$0xff]
        %v180 = vld [vmem:[%s1] sm:$0xf]
        %v181 = vld [vmem:[%s2] sm:$0x1]
        %v183 = vlaneseq
        %v184 = vshrl.u32 %v183, 7
        %v185 = vsub.s32 0, %v184
        %v186 = vrot.slane %v181, %v185
        %vm188 = vcmask 31744
        %v190 = vsel %vm188, %v172, 0
        %v193 = vsel %vm188, %v173, 0
        %v196 = vsel %vm188, %v174, 0
        %v199 = vsel %vm188, %v175, 0
        %v202 = vsel %vm188, %v176, 0
        %v205 = vsel %vm188, %v177, 0
        %v208 = vsel %vm188, %v178, 0
        %v211 = vsel %vm188, %v179, 0
        %vm213 = vcmask 1043456
        %v215 = vsel %vm213, %v180, 0
        %217 = vmatprep.subr.mxu0 0.0
        %218 = vmatpush1.msra.mxu0 %v215
        %219 = vmatprep.subr.mxu0 0.0
        %220 = vmatpush1.msra.mxu0 0.0
        %221 = vmatprep.subr.mxu0 0.0
        %222 = vmatpush1.msra.mxu0 0.0
        %223 = vmatprep.subr.mxu0 0.0
        %224 = vmatpush1.msra.mxu0 0.0
        %225 = vmatprep.subr.mxu0 0.0
        %226 = vmatpush1.msra.mxu0 0.0
        %227 = vmatprep.subr.mxu0 0.0
        %228 = vmatpush1.msra.mxu0 0.0
        %229 = vmatprep.subr.mxu0 0.0
        %230 = vmatpush1.msra.mxu0 0.0
        %231 = vmatprep.subr.mxu0 0.0
        %232 = vmatpush1.msra.mxu0 0.0
        %233 = vmatprep.subr.mxu0 0.0
        %234 = vmatpush1.msra.mxu0 0.0
        %235 = vmatprep.subr.mxu0 0.0
        %236 = vmatpush1.msra.mxu0 0.0
        %237 = vmatprep.subr.mxu0 0.0
        %238 = vmatpush1.msra.mxu0 0.0
        %239 = vmatprep.subr.mxu0 0.0
        %240 = vmatpush1.msra.mxu0 0.0
        %241 = vmatprep.subr.mxu0 0.0
        %242 = vmatpush1.msra.mxu0 0.0
        %243 = vmatprep.subr.mxu0 0.0
        %244 = vmatpush1.msra.mxu0 0.0
        %245 = vmatprep.subr.mxu0 0.0
        %246 = vmatpush1.msra.mxu0 0.0
        %247 = vmatprep.subr.mxu0 0.0
        %248 = vmatpush1.msra.mxu0 0.0
        %249 = vmatprep.subr.mxu0 0.0
        %250 = vmatpush1.msra.mxu0 0.0
        %251 = vmatprep.subr.mxu0 0.0
        %252 = vmatpush1.msra.mxu0 0.0
        %253 = vmatprep.subr.mxu0 0.0
        %254 = vmatpush1.msra.mxu0 0.0
        %255 = vmatprep.subr.mxu0 0.0
        %256 = vmatpush1.msra.mxu0 0.0
        %257 = vmatprep.subr.mxu0 0.0
        %258 = vmatpush1.msra.mxu0 0.0
        %259 = vmatprep.subr.mxu0 0.0
        %260 = vmatpush1.msra.mxu0 0.0
        %261 = vmatprep.subr.mxu0 0.0
        %262 = vmatpush1.msra.mxu0 0.0
        %263 = vmatprep.subr.mxu0 0.0
        %264 = vmatpush1.msra.mxu0 0.0
        %265 = vmatprep.subr.mxu0 0.0
        %266 = vmatpush1.msra.mxu0 0.0
        %267 = vmatprep.subr.mxu0 0.0
        %268 = vmatpush1.msra.mxu0 0.0
        %269 = vmatprep.subr.mxu0 0.0
        %270 = vmatpush1.msra.mxu0 0.0
        %271 = vmatprep.subr.mxu0 0.0
        %272 = vmatpush1.msra.mxu0 0.0
        %273 = vmatprep.subr.mxu0 0.0
        %274 = vmatpush1.msra.mxu0 0.0
        %275 = vmatprep.subr.mxu0 0.0
        %276 = vmatpush1.msra.mxu0 0.0
        %277 = vmatprep.subr.mxu0 0.0
        %278 = vmatpush1.msra.mxu0 0.0
        %279 = vmatprep.subr.mxu0 0.0
        %280 = vmatpush1.msra.mxu0 0.0
        %281 = vmatprep.mubr.f32.mxu0 0.0
        %282 = vmatmul.mubr.f32.gmra.mrb[0].mxu0 %v190
        %v283 = vpop.f32.mrb[0].mxu0
        %v284 = vadd.f32 %v186, %v283
        %v285 = vpop.f32.mrb[0].mxu0
        %286 = vmatprep.mubr.f32.mxu0 0.0
        %287 = vmatmul.mubr.f32.gmra.mrb[0].mxu0 %v193
        %v288 = vpop.f32.mrb[0].mxu0
        %v289 = vadd.f32 %v186, %v288
        %v290 = vpop.f32.mrb[0].mxu0
        %291 = vmatprep.mubr.f32.mxu0 0.0
        %292 = vmatmul.mubr.f32.gmra.mrb[0].mxu0 %v196
        %v293 = vpop.f32.mrb[0].mxu0
        %v294 = vadd.f32 %v186, %v293
        %v295 = vpop.f32.mrb[0].mxu0
        %296 = vmatprep.mubr.f32.mxu0 0.0
        %297 = vmatmul.mubr.f32.gmra.mrb[0].mxu0 %v199
        %v298 = vpop.f32.mrb[0].mxu0
        %v299 = vadd.f32 %v186, %v298
        %v300 = vpop.f32.mrb[0].mxu0
        %301 = vmatprep.mubr.f32.mxu0 0.0
        %302 = vmatmul.mubr.f32.gmra.mrb[0].mxu0 %v202
        %v303 = vpop.f32.mrb[0].mxu0
        %v304 = vadd.f32 %v186, %v303
        %v305 = vpop.f32.mrb[0].mxu0
        %306 = vmatprep.mubr.f32.mxu0 0.0
        %307 = vmatmul.mubr.f32.gmra.mrb[0].mxu0 %v205
        %v308 = vpop.f32.mrb[0].mxu0
        %v309 = vadd.f32 %v186, %v308
        %v310 = vpop.f32.mrb[0].mxu0
        %311 = vmatprep.mubr.f32.mxu0 0.0
        %312 = vmatmul.mubr.f32.gmra.mrb[0].mxu0 %v208
        %v313 = vpop.f32.mrb[0].mxu0
        %v314 = vadd.f32 %v186, %v313
        %v315 = vpop.f32.mrb[0].mxu0
        %316 = vmatprep.mubr.f32.mxu0 0.0
        %317 = vmatmul.mubr.f32.gmra.mrb[0].mxu0 %v211
        %v318 = vpop.f32.mrb[0].mxu0
        %v319 = vadd.f32 %v186, %v318
        %v320 = vpop.f32.mrb[0].mxu0
        %321 = vdwg.mxu0
        %vm322 = vcmask 261120
        %323 = vst.msk [vmem:[%s164] sm:$0xff] %vm322, %v284
        %324 = vst.msk [vmem:[%s164 + $0x8] sm:$0xff] %vm322, %v289
        %325 = vst.msk [vmem:[%s164 + $0x10] sm:$0xff] %vm322, %v294
        %326 = vst.msk [vmem:[%s164 + $0x18] sm:$0xff] %vm322, %v299
        %327 = vst.msk [vmem:[%s164 + $0x20] sm:$0xff] %vm322, %v304
        %328 = vst.msk [vmem:[%s164 + $0x28] sm:$0xff] %vm322, %v309
        %329 = vst.msk [vmem:[%s164 + $0x30] sm:$0xff] %vm322, %v314
        %330 = vst.msk [vmem:[%s164 + $0x38] sm:$0xff] %vm322, %v319
        %s331 = sand.u32 %s93, 1
        %s332 = scalar_lea.sflag [#allocation3], %s331
        %s333 = sand.u32 %s93, 1
        %s334 = smul.addr %s333, 64
        %s335 = scalar_lea.vmem [#allocation2], %s334
        // Predicated region
        $region33: #{tpu_custom_call.1} parent=31 // pred_check
          %p336 = pneg %p103
        $region34: #{tpu_custom_call.1} parent=31 // pred_check_branch
          %338 = sbr.rel (%p336) target = $region36
        $region35: #{tpu_custom_call.1} parent=31 // pred_region
          %s339 = smul.u32 8, %s17
          %s341 = ssub.s32 1024, 1024
          %342 = vsyncadd %s332, %s341
          %s343 = smul.addr %s339, 128
          %s344 = scalar_lea.hbm %s3, %s343
          %s345 = sshll.u32 %s335, 4
          %s346 = int_to_ptr.vmem [resolvable:$true] %s345
          %351 = dma.vmem_to_hbm [thread:$0]  %s346, 1024, %s344, %s332, 128, 128, 8
        $region36: #{tpu_custom_call.1} parent=31 // pred_fallthru
          _
      $region32: #{tpu_custom_call.1} parent=5 // pred_fallthru
        _
      %p352 = scmp.le.s32.totalorder 2, %s12
      // Predicated region
      $region37: #{tpu_custom_call.1} parent=5 // pred_check
        %p353 = pneg %p352
      $region38: #{tpu_custom_call.1} parent=5 // pred_check_branch
        %355 = sbr.rel (%p353) target = $region40
      $region39: #{tpu_custom_call.1} parent=5 // pred_region
        %s356 = ssub.s32 %s12, 2
        // Predicated region
        $region41: #{tpu_custom_call.1} parent=39 // pred_check
          %p357 = pneg %p109
        $region42: #{tpu_custom_call.1} parent=39 // pred_check_branch
          %359 = sbr.rel (%p357) target = $region44
        $region43: #{tpu_custom_call.1} parent=39 // pred_region
          %s360 = sand.u32 %s94, 1
          %s361 = scalar_lea.sflag [#allocation3], %s360
          %s362 = sand.u32 %s94, 1
          %s363 = smul.addr %s362, 64
          %s364 = scalar_lea.vmem [#allocation2], %s363
          %365 = dma.done %s361, 1024
        $region44: #{tpu_custom_call.1} parent=39 // pred_fallthru
          _
      $region40: #{tpu_custom_call.1} parent=5 // pred_fallthru
        _
    $region6: #{tpu_custom_call.1} parent=1 // loop_footer
      %s16 = sadd.s32 1, %s12
    $region7: #{tpu_custom_call.1} parent=1 // loop_footer_branch
      %11 = sbr.rel target = $region3
    $region8: #{tpu_custom_call.1} parent=1 // loop_exit
      _
    %366 = vsyncpa [#allocation3], 1
    %s367 = scalar_lea.sflag [#allocation3], 1
    %368 = vsyncpa %s367, 1

</llo_original>
